<compile_context>
chip_gen: v6e
topology: v6e:2x2x1
jax: 0.10.0
libtpu: 0.0.40
codegen_flags: <defaults>
</compile_context>

<pallas_src>
import functools

import jax
import jax.numpy as jnp
from jax.experimental import pallas as pl
from jax.experimental.pallas import tpu as pltpu

DROPOUT_P = 0.4
HIDDEN_SIZE = [128, 64, 32]
OUTPUT_SIZE = 10
LANE = 128      # pad every layer width to a multiple of this
SUBLANE = 8     # row-tile granularity


def _round_up(x, m):
    return ((x + m - 1) // m) * m


def _dropout(x, p):
    """Inverted dropout via the TPU HW PRNG; integer compare on raw bits."""
    bits = pltpu.bitcast(pltpu.prng_random_bits(x.shape), jnp.uint32)
    thresh = jnp.uint32(int((1.0 - p) * float(1 << 24)))
    keep = (bits & jnp.uint32(0x00FFFFFF)) < thresh
    return jnp.where(keep, x * (1.0 / (1.0 - p)), 0.0)


def mlp_kernel(seed_ref, x_ref, w1_ref, b1_ref, w2_ref, b2_ref,
               w3_ref, b3_ref, w4_ref, b4_ref, o_ref, *, training, p):
    if training:
        # distinct, decorrelated PRNG stream per batch tile
        pltpu.prng_seed(seed_ref[0], pl.program_id(0))

    # f32 activations arrive straight from HBM; cast to bf16 for the MXU here
    # (VPU work hidden under the activation DMA).
    x = x_ref[...].astype(jnp.bfloat16)

    # hidden1 -> dropout -> relu   (bf16 operands on MXU, f32 accumulate)
    h = jnp.dot(x, w1_ref[...], preferred_element_type=jnp.float32) + b1_ref[...]
    if training:
        h = _dropout(h, p)
    h = jnp.maximum(h, 0.0).astype(jnp.bfloat16)

    # hidden2 -> dropout -> relu
    h = jnp.dot(h, w2_ref[...], preferred_element_type=jnp.float32) + b2_ref[...]
    if training:
        h = _dropout(h, p)
    h = jnp.maximum(h, 0.0).astype(jnp.bfloat16)

    # hidden3 -> dropout -> relu
    h = jnp.dot(h, w3_ref[...], preferred_element_type=jnp.float32) + b3_ref[...]
    if training:
        h = _dropout(h, p)
    h = jnp.maximum(h, 0.0).astype(jnp.bfloat16)

    # output layer: lane-dense (128-lane padded) bf16 logits -> halves the write
    logits = jnp.dot(h, w4_ref[...], preferred_element_type=jnp.float32) + b4_ref[...]
    o_ref[...] = logits.astype(o_ref.dtype)


def init_params(key, input_size, hidden_size, output_size):
    """PyTorch-style uniform(-1/sqrt(fan_in), 1/sqrt(fan_in)) init.
    Weights stored already transposed to [in, out]; biases as [1, out]."""
    dims = [input_size] + list(hidden_size) + [output_size]
    params = []
    for i in range(len(dims) - 1):
        fan_in, fan_out = dims[i], dims[i + 1]
        key, kw, kb = jax.random.split(key, 3)
        bound = 1.0 / jnp.sqrt(jnp.float32(fan_in))
        w = jax.random.uniform(kw, (fan_in, fan_out), jnp.float32, -bound, bound)
        b = jax.random.uniform(kb, (1, fan_out), jnp.float32, -bound, bound)
        params.append((w, b))
    return params


def prepare_params(params):
    """Zero-pad every layer width up to a multiple of LANE (lane-dense MXU
    tiles, unmasked stores) and cast weights to bf16.  Biases stay f32.
    Padded rows/cols are exact zeros, so they are inert through bias add,
    dropout and ReLU."""
    prepped = []
    for w, b in params:
        fi, fo = w.shape
        fi_p, fo_p = _round_up(fi, LANE), _round_up(fo, LANE)
        wp = jnp.pad(w, ((0, fi_p - fi), (0, fo_p - fo))).astype(jnp.bfloat16)
        bp = jnp.pad(b, ((0, 0), (0, fo_p - fo))).astype(jnp.float32)
        prepped.append((wp, bp))
    return prepped


def _choose_row_tile(batch, block_rows):
    """Row tile: multiple of 8 sublanes, <= block_rows, and small enough that
    the grid has >=2 steps when B > 8 (so v7x's two TensorCores both work)."""
    b8 = _round_up(max(batch, 1), SUBLANE)
    if b8 <= SUBLANE:
        return SUBLANE
    half = _round_up(-(-b8 // 2), SUBLANE)          # ceil(B/2) rounded to 8
    return max(SUBLANE, min(block_rows, half))


def gurmukhi_classifier_forward(x, params, *, training=False, dropout_p=DROPOUT_P,
                                seed=0, block_rows=2048):
    B, d_in = x.shape
    out_dim = params[-1][0].shape[1]
    (w1, b1), (w2, b2), (w3, b3), (w4, b4) = prepare_params(params)
    d_in_p = w1.shape[0]
    d_out_p = w4.shape[1]

    tm = _choose_row_tile(B, block_rows)
    Bp = _round_up(B, tm)

    # Keep x in f32; only materialize a pad if the shapes actually require it
    # (demo shapes: no-op).  The bf16 cast happens inside the kernel.
    if (Bp, d_in_p) != (B, d_in):
        x = jnp.pad(x, ((0, Bp - B), (0, d_in_p - d_in)))

    seed_arr = jnp.array([seed], dtype=jnp.int32)
    kernel = functools.partial(mlp_kernel, training=training, p=dropout_p)

    def rows(i, seed_ref):        # batch-tiled arrays
        return (i, 0)

    def resident(i, seed_ref):    # weights/biases stay in VMEM across all tiles
        return (0, 0)

    grid_spec = pltpu.PrefetchScalarGridSpec(
        num_scalar_prefetch=1,
        grid=(Bp // tm,),
        in_specs=[
            pl.BlockSpec((tm, d_in_p), rows),
            pl.BlockSpec(w1.shape, resident), pl.BlockSpec(b1.shape, resident),
            pl.BlockSpec(w2.shape, resident), pl.BlockSpec(b2.shape, resident),
            pl.BlockSpec(w3.shape, resident), pl.BlockSpec(b3.shape, resident),
            pl.BlockSpec(w4.shape, resident), pl.BlockSpec(b4.shape, resident),
        ],
        out_specs=pl.BlockSpec((tm, d_out_p), rows),
    )

    compiler_params = pltpu.CompilerParams(
        dimension_semantics=("parallel",),   # batch tiles are independent
        # only needed if the tile is pushed past ~4096 rows (v7x scoped VMEM)
        vmem_limit_bytes=(64 * 1024 * 1024) if tm > 4096 else None,
    )

    out = pl.pallas_call(
        kernel,
        out_shape=jax.ShapeDtypeStruct((Bp, d_out_p), jnp.bfloat16),
        grid_spec=grid_spec,
        compiler_params=compiler_params,
    )(seed_arr, x, w1, b1, w2, b2, w3, b3, w4, b4)

    # Tiny [B, 10] slice; cast logits back to f32 for the caller.  A fused
    # downstream consumer (softmax/argmax) could read the padded bf16 buffer
    # directly and skip this.
    return out[:B, :out_dim].astype(jnp.float32)


def reference_forward(x, params):
    """Pure-JAX reference matching the kernel's bf16-operand / f32-accumulate math."""
    q = lambda a: a.astype(jnp.bfloat16).astype(jnp.float32)
    h = x
    n = len(params)
    for i, (w, b) in enumerate(params):
        h = q(h) @ q(w) + b
        if i < n - 1:
            h = jnp.maximum(h, 0.0)
    return h


if __name__ == "__main__":
    key = jax.random.PRNGKey(0)
    k_data, k_params = jax.random.split(key)

    # Small, module-consistent shapes: 8 flattened 16x16 "images" scaled to [0, 1].
    batch = 8
    input_size = 16 * 16  # flattened image -> input_size = X_train_data.shape[1]
    x_raw = jax.random.uniform(k_data, (batch, input_size), jnp.float32, 0.0, 255.0)
    x = x_raw / 255.0

    params = init_params(k_params, input_size, HIDDEN_SIZE, OUTPUT_SIZE)

    # eval-mode forward (dropout = identity), matching module.eval() semantics
    out = gurmukhi_classifier_forward(x, params, training=False)
    out = jax.block_until_ready(out)

    ref = reference_forward(x, params)
    assert out.shape == (batch, OUTPUT_SIZE)
    # bf16 logit store => slightly looser tolerance than a pure-f32 output
    assert jnp.allclose(out, ref, atol=2e-2, rtol=2e-2), "mismatch vs reference"

    print("KERNEL_OK")
</pallas_src>

<mosaic_0001>
module attributes {stable_mosaic.version = 11 : i64} {
  func.func @mlp_kernel(%arg0: i32, %arg1: memref<1xi32, #tpu.memory_space<smem>>, %arg2: memref<8x256xf32, #tpu.memory_space<vmem>>, %arg3: memref<256x128xbf16, #tpu.memory_space<vmem>>, %arg4: memref<1x128xf32, #tpu.memory_space<vmem>>, %arg5: memref<128x128xbf16, #tpu.memory_space<vmem>>, %arg6: memref<1x128xf32, #tpu.memory_space<vmem>>, %arg7: memref<128x128xbf16, #tpu.memory_space<vmem>>, %arg8: memref<1x128xf32, #tpu.memory_space<vmem>>, %arg9: memref<128x128xbf16, #tpu.memory_space<vmem>>, %arg10: memref<1x128xf32, #tpu.memory_space<vmem>>, %arg11: memref<8x128xbf16, #tpu.memory_space<vmem>>) attributes {dimension_semantics = [#tpu.dimension_semantics<parallel>], iteration_bounds = array<i64: 1>, scalar_prefetch = 1 : i64, scratch_operands = 0 : i64, tpu.core_type = #tpu.core_type<tc>, window_params = [{transform_indices = @transform_0, window_bounds = array<i64: 8, 256>}, {pipeline_mode = #tpu.pipeline_mode<synchronous>, transform_indices = @transform_1, window_bounds = array<i64: 256, 128>}, {pipeline_mode = #tpu.pipeline_mode<synchronous>, transform_indices = @transform_2, window_bounds = array<i64: 1, 128>}, {pipeline_mode = #tpu.pipeline_mode<synchronous>, transform_indices = @transform_3, window_bounds = array<i64: 128, 128>}, {pipeline_mode = #tpu.pipeline_mode<synchronous>, transform_indices = @transform_4, window_bounds = array<i64: 1, 128>}, {pipeline_mode = #tpu.pipeline_mode<synchronous>, transform_indices = @transform_5, window_bounds = array<i64: 128, 128>}, {pipeline_mode = #tpu.pipeline_mode<synchronous>, transform_indices = @transform_6, window_bounds = array<i64: 1, 128>}, {pipeline_mode = #tpu.pipeline_mode<synchronous>, transform_indices = @transform_7, window_bounds = array<i64: 128, 128>}, {pipeline_mode = #tpu.pipeline_mode<synchronous>, transform_indices = @transform_8, window_bounds = array<i64: 1, 128>}, {transform_indices = @transform_9, window_bounds = array<i64: 8, 128>}]} {
    %c0 = arith.constant 0 : index
    %c0_0 = arith.constant 0 : index
    %0 = vector.load %arg2[%c0, %c0_0] : memref<8x256xf32, #tpu.memory_space<vmem>>, vector<8x256xf32>
    %1 = arith.truncf %0 : vector<8x256xf32> to vector<8x256xbf16>
    %c0_1 = arith.constant 0 : index
    %c0_2 = arith.constant 0 : index
    %2 = vector.load %arg3[%c0_1, %c0_2] : memref<256x128xbf16, #tpu.memory_space<vmem>>, vector<256x128xbf16>
    %cst = arith.constant dense<0.000000e+00> : vector<8x128xf32>
    %3 = tpu.matmul %1, %2, %cst {dimension_numbers = #tpu.dot_dimension_numbers<[1], [0], [0], [1], [0, 0, 1, 1], [], []>} : vector<8x256xbf16>, vector<256x128xbf16>, vector<8x128xf32> -> vector<8x128xf32>
    %c0_3 = arith.constant 0 : index
    %c0_4 = arith.constant 0 : index
    %4 = vector.load %arg4[%c0_3, %c0_4] : memref<1x128xf32, #tpu.memory_space<vmem>>, vector<1x128xf32>
    %5 = vector.broadcast %4 : vector<1x128xf32> to vector<8x128xf32>
    %6 = arith.addf %3, %5 : vector<8x128xf32>
    %cst_5 = arith.constant 0.000000e+00 : f32
    %7 = vector.broadcast %cst_5 : f32 to vector<8x128xf32>
    %8 = arith.maximumf %6, %7 : vector<8x128xf32>
    %9 = arith.truncf %8 : vector<8x128xf32> to vector<8x128xbf16>
    %c0_6 = arith.constant 0 : index
    %c0_7 = arith.constant 0 : index
    %10 = vector.load %arg5[%c0_6, %c0_7] : memref<128x128xbf16, #tpu.memory_space<vmem>>, vector<128x128xbf16>
    %cst_8 = arith.constant dense<0.000000e+00> : vector<8x128xf32>
    %11 = tpu.matmul %9, %10, %cst_8 {dimension_numbers = #tpu.dot_dimension_numbers<[1], [0], [0], [1], [0, 0, 1, 1], [], []>} : vector<8x128xbf16>, vector<128x128xbf16>, vector<8x128xf32> -> vector<8x128xf32>
    %c0_9 = arith.constant 0 : index
    %c0_10 = arith.constant 0 : index
    %12 = vector.load %arg6[%c0_9, %c0_10] : memref<1x128xf32, #tpu.memory_space<vmem>>, vector<1x128xf32>
    %13 = vector.broadcast %12 : vector<1x128xf32> to vector<8x128xf32>
    %14 = arith.addf %11, %13 : vector<8x128xf32>
    %cst_11 = arith.constant 0.000000e+00 : f32
    %15 = vector.broadcast %cst_11 : f32 to vector<8x128xf32>
    %16 = arith.maximumf %14, %15 : vector<8x128xf32>
    %17 = arith.truncf %16 : vector<8x128xf32> to vector<8x128xbf16>
    %c0_12 = arith.constant 0 : index
    %c0_13 = arith.constant 0 : index
    %18 = vector.load %arg7[%c0_12, %c0_13] : memref<128x128xbf16, #tpu.memory_space<vmem>>, vector<128x128xbf16>
    %cst_14 = arith.constant dense<0.000000e+00> : vector<8x128xf32>
    %19 = tpu.matmul %17, %18, %cst_14 {dimension_numbers = #tpu.dot_dimension_numbers<[1], [0], [0], [1], [0, 0, 1, 1], [], []>} : vector<8x128xbf16>, vector<128x128xbf16>, vector<8x128xf32> -> vector<8x128xf32>
    %c0_15 = arith.constant 0 : index
    %c0_16 = arith.constant 0 : index
    %20 = vector.load %arg8[%c0_15, %c0_16] : memref<1x128xf32, #tpu.memory_space<vmem>>, vector<1x128xf32>
    %21 = vector.broadcast %20 : vector<1x128xf32> to vector<8x128xf32>
    %22 = arith.addf %19, %21 : vector<8x128xf32>
    %cst_17 = arith.constant 0.000000e+00 : f32
    %23 = vector.broadcast %cst_17 : f32 to vector<8x128xf32>
    %24 = arith.maximumf %22, %23 : vector<8x128xf32>
    %25 = arith.truncf %24 : vector<8x128xf32> to vector<8x128xbf16>
    %c0_18 = arith.constant 0 : index
    %c0_19 = arith.constant 0 : index
    %26 = vector.load %arg9[%c0_18, %c0_19] : memref<128x128xbf16, #tpu.memory_space<vmem>>, vector<128x128xbf16>
    %cst_20 = arith.constant dense<0.000000e+00> : vector<8x128xf32>
    %27 = tpu.matmul %25, %26, %cst_20 {dimension_numbers = #tpu.dot_dimension_numbers<[1], [0], [0], [1], [0, 0, 1, 1], [], []>} : vector<8x128xbf16>, vector<128x128xbf16>, vector<8x128xf32> -> vector<8x128xf32>
    %c0_21 = arith.constant 0 : index
    %c0_22 = arith.constant 0 : index
    %28 = vector.load %arg10[%c0_21, %c0_22] : memref<1x128xf32, #tpu.memory_space<vmem>>, vector<1x128xf32>
    %29 = vector.broadcast %28 : vector<1x128xf32> to vector<8x128xf32>
    %30 = arith.addf %27, %29 : vector<8x128xf32>
    %31 = arith.truncf %30 : vector<8x128xf32> to vector<8x128xbf16>
    %c0_23 = arith.constant 0 : index
    %c0_24 = arith.constant 0 : index
    %32 = vector.load %arg11[%c0_23, %c0_24] : memref<8x128xbf16, #tpu.memory_space<vmem>>, vector<8x128xbf16>
    tpu.vector_store %arg11[%c0_23, %c0_24], %31 {strides = array<i32>} : memref<8x128xbf16, #tpu.memory_space<vmem>>, vector<8x128xbf16>,
    return
  }
  func.func @transform_0(%arg0: i32, %arg1: memref<1xi32, #tpu.memory_space<smem>>) -> (i32, i32) {
    %c0_i32 = arith.constant 0 : i32
    %c0_i32_0 = arith.constant 0 : i32
    return %arg0, %c0_i32 : i32, i32
  }
  func.func @transform_1(%arg0: i32, %arg1: memref<1xi32, #tpu.memory_space<smem>>) -> (i32, i32) {
    %c0_i32 = arith.constant 0 : i32
    %c0_i32_0 = arith.constant 0 : i32
    %c0_i32_1 = arith.constant 0 : i32
    return %c0_i32, %c0_i32_0 : i32, i32
  }
  func.func @transform_2(%arg0: i32, %arg1: memref<1xi32, #tpu.memory_space<smem>>) -> (i32, i32) {
    %c0_i32 = arith.constant 0 : i32
    %c0_i32_0 = arith.constant 0 : i32
    %c0_i32_1 = arith.constant 0 : i32
    return %c0_i32, %c0_i32_0 : i32, i32
  }
  func.func @transform_3(%arg0: i32, %arg1: memref<1xi32, #tpu.memory_space<smem>>) -> (i32, i32) {
    %c0_i32 = arith.constant 0 : i32
    %c0_i32_0 = arith.constant 0 : i32
    %c0_i32_1 = arith.constant 0 : i32
    return %c0_i32, %c0_i32_0 : i32, i32
  }
  func.func @transform_4(%arg0: i32, %arg1: memref<1xi32, #tpu.memory_space<smem>>) -> (i32, i32) {
    %c0_i32 = arith.constant 0 : i32
    %c0_i32_0 = arith.constant 0 : i32
    %c0_i32_1 = arith.constant 0 : i32
    return %c0_i32, %c0_i32_0 : i32, i32
  }
  func.func @transform_5(%arg0: i32, %arg1: memref<1xi32, #tpu.memory_space<smem>>) -> (i32, i32) {
    %c0_i32 = arith.constant 0 : i32
    %c0_i32_0 = arith.constant 0 : i32
    %c0_i32_1 = arith.constant 0 : i32
    return %c0_i32, %c0_i32_0 : i32, i32
  }
  func.func @transform_6(%arg0: i32, %arg1: memref<1xi32, #tpu.memory_space<smem>>) -> (i32, i32) {
    %c0_i32 = arith.constant 0 : i32
    %c0_i32_0 = arith.constant 0 : i32
    %c0_i32_1 = arith.constant 0 : i32
    return %c0_i32, %c0_i32_0 : i32, i32
  }
  func.func @transform_7(%arg0: i32, %arg1: memref<1xi32, #tpu.memory_space<smem>>) -> (i32, i32) {
    %c0_i32 = arith.constant 0 : i32
    %c0_i32_0 = arith.constant 0 : i32
    %c0_i32_1 = arith.constant 0 : i32
    return %c0_i32, %c0_i32_0 : i32, i32
  }
  func.func @transform_8(%arg0: i32, %arg1: memref<1xi32, #tpu.memory_space<smem>>) -> (i32, i32) {
    %c0_i32 = arith.constant 0 : i32
    %c0_i32_0 = arith.constant 0 : i32
    %c0_i32_1 = arith.constant 0 : i32
    return %c0_i32, %c0_i32_0 : i32, i32
  }
  func.func @transform_9(%arg0: i32, %arg1: memref<1xi32, #tpu.memory_space<smem>>) -> (i32, i32) {
    %c0_i32 = arith.constant 0 : i32
    %c0_i32_0 = arith.constant 0 : i32
    return %arg0, %c0_i32 : i32, i32
  }
}

</mosaic_0001>

<llo_original>
// kernel: tpu_custom_call.1
$region0: #{tpu_custom_call.1}
  #allocation0 [shape = 'u32[]', space=smem, size = 0x4, offset = 0x4, fixed_abs, tag = 'smem constant byte address 0x4 - core index']
  #allocation1 [shape = 'u32[144,128]{1,0:T(1,128)}', space=vmem, size = 0x12000, scoped, tag = 'internal scratch']
  #allocation2 [shape = 's32[1]{0}', space=sflag, size = 0x4, scoped, tag = 'scoped memory for tpu_custom_call.1']
  #allocation3 [shape = 's32[1]{0:T(128)S(6)}', space=smem, size = 0x200, scoped, tag = 'prefetched SMEM operand 0']
  %s0 = inlined_call_operand.<no memory space> [shape: s32[1], index: 0, kind: input, shape index: {}]
  %s1 = inlined_call_operand.hbm [shape: f32[8,256], index: 1, kind: input, shape index: {}]
  %s2 = inlined_call_operand.hbm [shape: bf16[256,128], index: 2, kind: input, shape index: {}]
  %s3 = inlined_call_operand.vmem [shape: f32[1,128], index: 3, kind: input, shape index: {}]
  %s4 = inlined_call_operand.hbm [shape: bf16[128,128], index: 4, kind: input, shape index: {}]
  %s5 = inlined_call_operand.vmem [shape: f32[1,128], index: 5, kind: input, shape index: {}]
  %s6 = inlined_call_operand.hbm [shape: bf16[128,128], index: 6, kind: input, shape index: {}]
  %s7 = inlined_call_operand.vmem [shape: f32[1,128], index: 7, kind: input, shape index: {}]
  %s8 = inlined_call_operand.hbm [shape: bf16[128,128], index: 8, kind: input, shape index: {}]
  %s9 = inlined_call_operand.vmem [shape: f32[1,128], index: 9, kind: input, shape index: {}]
  %s10 = inlined_call_operand.hbm [shape: bf16[8,128], index: 10, kind: output, shape index: {}]
  %s11 = sld [smem:[#allocation0]]
  $region66: #{tpu_custom_call.1} parent=0
    _
  %s13 = ssub.s32 1, %s11
  %s14 = scalar_select 0, %s13, %s11
  %15 = sst [smem:[#allocation3]] %s0
  $region1: #{tpu_custom_call.1} parent=0
    #allocation4 [shape = 'u8[8192]{0}', space=vmem, size = 0x2000, scoped, tag = 'input window, operand 1, single buffered']
    #allocation5 [shape = 's32[1]{0}', space=sflag, size = 0x4, scoped, tag = 'scoped memory for tpu_custom_call.1']
    #allocation6 [shape = 's32[1]{0}', space=sflag, size = 0x4, scoped, tag = 'scoped memory for tpu_custom_call.1']
    #allocation7 [shape = 'u8[65536]{0}', space=vmem, size = 0x10000, scoped, tag = 'input window, operand 2, single buffered']
    #allocation8 [shape = 's32[1]{0}', space=sflag, size = 0x4, scoped, tag = 'scoped memory for tpu_custom_call.1']
    #allocation9 [shape = 'u8[32768]{0}', space=vmem, size = 0x8000, scoped, tag = 'input window, operand 4, single buffered']
    #allocation10 [shape = 'u8[32768]{0}', space=vmem, size = 0x8000, scoped, tag = 'input window, operand 6, single buffered']
    #allocation11 [shape = 's32[1]{0}', space=sflag, size = 0x4, scoped, tag = 'scoped memory for tpu_custom_call.1']
    #allocation12 [shape = 'u8[32768]{0}', space=vmem, size = 0x8000, scoped, tag = 'input window, operand 8, single buffered']
    #allocation13 [shape = 'u8[2048]{0}', space=vmem, size = 0x800, scoped, tag = 'output window, operand 0, single buffered']
    %16 = vsyncpa [#allocation5], 0
    %17 = vsyncpa [#allocation8], 0
    %18 = vsyncpa [#allocation11], 0
    %19 = vsyncpa [#allocation6], 0
    // Predicated region
    $region2: #{tpu_custom_call.1} parent=1 // pred_check
      _
    $region3: #{tpu_custom_call.1} parent=1 // pred_check_branch
      %21 = sbr.rel (0) target = $region5
    $region4: #{tpu_custom_call.1} parent=1 // pred_region
      %s23 = ssub.s32 256, 256
      %24 = vsyncadd [#allocation5], %s23
      %s26 = sshll.u32 [#allocation4], 4
      %s27 = int_to_ptr.vmem [resolvable:$true] %s26
      %29 = dma.hbm_to_vmem [thread:$0]  %s1, 256, %s27, [#allocation5]
    $region5: #{tpu_custom_call.1} parent=1 // pred_fallthru
      _
    // Predicated region
    $region6: #{tpu_custom_call.1} parent=1 // pred_check
      _
    $region7: #{tpu_custom_call.1} parent=1 // pred_check_branch
      %31 = sbr.rel (0) target = $region9
    $region8: #{tpu_custom_call.1} parent=1 // pred_region
      %s33 = ssub.s32 2048, 2048
      %34 = vsyncadd [#allocation8], %s33
      %s35 = sshll.u32 [#allocation7], 4
      %s36 = int_to_ptr.vmem [resolvable:$true] %s35
      %41 = dma.hbm_to_vmem [thread:$0]  %s2, 2048, %s36, [#allocation8], 64, 64, 4
    $region9: #{tpu_custom_call.1} parent=1 // pred_fallthru
      _
    // Predicated region
    $region10: #{tpu_custom_call.1} parent=1 // pred_check
      _
    $region11: #{tpu_custom_call.1} parent=1 // pred_check_branch
      %43 = sbr.rel (0) target = $region13
    $region12: #{tpu_custom_call.1} parent=1 // pred_region
      _
    $region13: #{tpu_custom_call.1} parent=1 // pred_fallthru
      _
    // Predicated region
    $region14: #{tpu_custom_call.1} parent=1 // pred_check
      _
    $region15: #{tpu_custom_call.1} parent=1 // pred_check_branch
      %45 = sbr.rel (0) target = $region17
    $region16: #{tpu_custom_call.1} parent=1 // pred_region
      %s47 = ssub.s32 1024, 1024
      %48 = vsyncadd [#allocation8], %s47
      %s49 = sshll.u32 [#allocation9], 4
      %s50 = int_to_ptr.vmem [resolvable:$true] %s49
      %55 = dma.hbm_to_vmem [thread:$0]  %s4, 1024, %s50, [#allocation8], 64, 64, 4
    $region17: #{tpu_custom_call.1} parent=1 // pred_fallthru
      _
    // Predicated region
    $region18: #{tpu_custom_call.1} parent=1 // pred_check
      _
    $region19: #{tpu_custom_call.1} parent=1 // pred_check_branch
      %57 = sbr.rel (0) target = $region21
    $region20: #{tpu_custom_call.1} parent=1 // pred_region
      _
    $region21: #{tpu_custom_call.1} parent=1 // pred_fallthru
      _
    // Predicated region
    $region22: #{tpu_custom_call.1} parent=1 // pred_check
      _
    $region23: #{tpu_custom_call.1} parent=1 // pred_check_branch
      %59 = sbr.rel (0) target = $region25
    $region24: #{tpu_custom_call.1} parent=1 // pred_region
      %s61 = ssub.s32 1024, 1024
      %62 = vsyncadd [#allocation11], %s61
      %s63 = sshll.u32 [#allocation10], 4
      %s64 = int_to_ptr.vmem [resolvable:$true] %s63
      %69 = dma.hbm_to_vmem [thread:$0]  %s6, 1024, %s64, [#allocation11], 64, 64, 4
    $region25: #{tpu_custom_call.1} parent=1 // pred_fallthru
      _
    // Predicated region
    $region26: #{tpu_custom_call.1} parent=1 // pred_check
      _
    $region27: #{tpu_custom_call.1} parent=1 // pred_check_branch
      %71 = sbr.rel (0) target = $region29
    $region28: #{tpu_custom_call.1} parent=1 // pred_region
      _
    $region29: #{tpu_custom_call.1} parent=1 // pred_fallthru
      _
    // Predicated region
    $region30: #{tpu_custom_call.1} parent=1 // pred_check
      _
    $region31: #{tpu_custom_call.1} parent=1 // pred_check_branch
      %73 = sbr.rel (0) target = $region33
    $region32: #{tpu_custom_call.1} parent=1 // pred_region
      %s75 = ssub.s32 1024, 1024
      %76 = vsyncadd [#allocation11], %s75
      %s77 = sshll.u32 [#allocation12], 4
      %s78 = int_to_ptr.vmem [resolvable:$true] %s77
      %83 = dma.hbm_to_vmem [thread:$0]  %s8, 1024, %s78, [#allocation11], 64, 64, 4
    $region33: #{tpu_custom_call.1} parent=1 // pred_fallthru
      _
    // Predicated region
    $region34: #{tpu_custom_call.1} parent=1 // pred_check
      _
    $region35: #{tpu_custom_call.1} parent=1 // pred_check_branch
      %85 = sbr.rel (0) target = $region37
    $region36: #{tpu_custom_call.1} parent=1 // pred_region
      _
    $region37: #{tpu_custom_call.1} parent=1 // pred_fallthru
      _
    // Predicated region
    $region38: #{tpu_custom_call.1} parent=1 // pred_check
      _
    $region39: #{tpu_custom_call.1} parent=1 // pred_check_branch
      %87 = sbr.rel (0) target = $region41
    $region40: #{tpu_custom_call.1} parent=1 // pred_region
      %88 = dma.done [#allocation5], 256
    $region41: #{tpu_custom_call.1} parent=1 // pred_fallthru
      _
    // Predicated region
    $region42: #{tpu_custom_call.1} parent=1 // pred_check
      _
    $region43: #{tpu_custom_call.1} parent=1 // pred_check_branch
      %90 = sbr.rel (0) target = $region45
    $region44: #{tpu_custom_call.1} parent=1 // pred_region
      %91 = dma.done [#allocation8], 2048
    $region45: #{tpu_custom_call.1} parent=1 // pred_fallthru
      _
    // Predicated region
    $region46: #{tpu_custom_call.1} parent=1 // pred_check
      _
    $region47: #{tpu_custom_call.1} parent=1 // pred_check_branch
      %93 = sbr.rel (0) target = $region49
    $region48: #{tpu_custom_call.1} parent=1 // pred_region
      %94 = dma.done [#allocation8], 1024
    $region49: #{tpu_custom_call.1} parent=1 // pred_fallthru
      _
    // Predicated region
    $region50: #{tpu_custom_call.1} parent=1 // pred_check
      _
    $region51: #{tpu_custom_call.1} parent=1 // pred_check_branch
      %96 = sbr.rel (0) target = $region53
    $region52: #{tpu_custom_call.1} parent=1 // pred_region
      %97 = dma.done [#allocation11], 1024
    $region53: #{tpu_custom_call.1} parent=1 // pred_fallthru
      _
    // Predicated region
    $region54: #{tpu_custom_call.1} parent=1 // pred_check
      _
    $region55: #{tpu_custom_call.1} parent=1 // pred_check_branch
      %99 = sbr.rel (0) target = $region57
    $region56: #{tpu_custom_call.1} parent=1 // pred_region
      %100 = dma.done [#allocation11], 1024
    $region57: #{tpu_custom_call.1} parent=1 // pred_fallthru
      _
    %v102 = vld [vmem:[#allocation4] sm:$0xff]
    %v103 = vld [vmem:[#allocation4 + $0x8] sm:$0xff]
    %v104 = vpack.c.bf16 %v102, %v102
    %v105 = vpack.c.bf16 %v103, %v103
    %v106 = vld [vmem:[#allocation7] sm:$0xf]
    %v107 = vld [vmem:[#allocation7 + $0x4] sm:$0xf]
    %v108 = vld [vmem:[#allocation7 + $0x8] sm:$0xf]
    %v109 = vld [vmem:[#allocation7 + $0xc] sm:$0xf]
    %v110 = vld [vmem:[#allocation7 + $0x10] sm:$0xf]
    %v111 = vld [vmem:[#allocation7 + $0x14] sm:$0xf]
    %v112 = vld [vmem:[#allocation7 + $0x18] sm:$0xf]
    %v113 = vld [vmem:[#allocation7 + $0x1c] sm:$0xf]
    %v114 = vld [vmem:[#allocation7 + $0x20] sm:$0xf]
    %v115 = vld [vmem:[#allocation7 + $0x24] sm:$0xf]
    %v116 = vld [vmem:[#allocation7 + $0x28] sm:$0xf]
    %v117 = vld [vmem:[#allocation7 + $0x2c] sm:$0xf]
    %v118 = vld [vmem:[#allocation7 + $0x30] sm:$0xf]
    %v119 = vld [vmem:[#allocation7 + $0x34] sm:$0xf]
    %v120 = vld [vmem:[#allocation7 + $0x38] sm:$0xf]
    %v121 = vld [vmem:[#allocation7 + $0x3c] sm:$0xf]
    %v122 = vld [vmem:[#allocation7 + $0x40] sm:$0xf]
    %v123 = vld [vmem:[#allocation7 + $0x44] sm:$0xf]
    %v124 = vld [vmem:[#allocation7 + $0x48] sm:$0xf]
    %v125 = vld [vmem:[#allocation7 + $0x4c] sm:$0xf]
    %v126 = vld [vmem:[#allocation7 + $0x50] sm:$0xf]
    %v127 = vld [vmem:[#allocation7 + $0x54] sm:$0xf]
    %v128 = vld [vmem:[#allocation7 + $0x58] sm:$0xf]
    %v129 = vld [vmem:[#allocation7 + $0x5c] sm:$0xf]
    %v130 = vld [vmem:[#allocation7 + $0x60] sm:$0xf]
    %v131 = vld [vmem:[#allocation7 + $0x64] sm:$0xf]
    %v132 = vld [vmem:[#allocation7 + $0x68] sm:$0xf]
    %v133 = vld [vmem:[#allocation7 + $0x6c] sm:$0xf]
    %v134 = vld [vmem:[#allocation7 + $0x70] sm:$0xf]
    %v135 = vld [vmem:[#allocation7 + $0x74] sm:$0xf]
    %v136 = vld [vmem:[#allocation7 + $0x78] sm:$0xf]
    %v137 = vld [vmem:[#allocation7 + $0x7c] sm:$0xf]
    %v138 = vld [vmem:[%s3] sm:$0x1]
    %v140 = vlaneseq
    %v141 = vshrl.u32 %v140, 7
    %v142 = vsub.s32 0, %v141
    %v143 = vrot.slane %v138, %v142
    %v177 = vunpack.c.l.b16 %v106
    %v178 = vunpack.c.l.b16 %v107
    %v179 = vunpack.c.l.b16 %v108
    %v180 = vunpack.c.l.b16 %v109
    %v181 = vunpack.c.l.b16 %v110
    %v182 = vunpack.c.l.b16 %v111
    %v183 = vunpack.c.l.b16 %v112
    %v184 = vunpack.c.l.b16 %v113
    %v185 = vunpack.c.l.b16 %v114
    %v186 = vunpack.c.l.b16 %v115
    %v187 = vunpack.c.l.b16 %v116
    %v188 = vunpack.c.l.b16 %v117
    %v189 = vunpack.c.l.b16 %v118
    %v190 = vunpack.c.l.b16 %v119
    %v191 = vunpack.c.l.b16 %v120
    %v192 = vunpack.c.l.b16 %v121
    %v193 = vunpack.c.l.b16 %v122
    %v194 = vunpack.c.l.b16 %v123
    %v195 = vunpack.c.l.b16 %v124
    %v196 = vunpack.c.l.b16 %v125
    %v197 = vunpack.c.l.b16 %v126
    %v198 = vunpack.c.l.b16 %v127
    %v199 = vunpack.c.l.b16 %v128
    %v200 = vunpack.c.l.b16 %v129
    %v201 = vunpack.c.l.b16 %v130
    %v202 = vunpack.c.l.b16 %v131
    %v203 = vunpack.c.l.b16 %v132
    %v204 = vunpack.c.l.b16 %v133
    %v205 = vunpack.c.l.b16 %v134
    %v206 = vunpack.c.l.b16 %v135
    %v207 = vunpack.c.l.b16 %v136
    %v208 = vunpack.c.l.b16 %v137
    %v209 = vpack.c.b16 %v178, %v177
    %v210 = vpack.c.b16 %v180, %v179
    %v211 = vpack.c.b16 %v182, %v181
    %v212 = vpack.c.b16 %v184, %v183
    %v213 = vpack.c.b16 %v186, %v185
    %v214 = vpack.c.b16 %v188, %v187
    %v215 = vpack.c.b16 %v190, %v189
    %v216 = vpack.c.b16 %v192, %v191
    %v217 = vpack.c.b16 %v194, %v193
    %v218 = vpack.c.b16 %v196, %v195
    %v219 = vpack.c.b16 %v198, %v197
    %v220 = vpack.c.b16 %v200, %v199
    %v221 = vpack.c.b16 %v202, %v201
    %v222 = vpack.c.b16 %v204, %v203
    %v223 = vpack.c.b16 %v206, %v205
    %v224 = vpack.c.b16 %v208, %v207
    %241 = vmatprep.subr.bf16.mxu0 0
    %242 = vmatpush1.bf16.msra.mxu0 %v216
    %243 = vmatprep.subr.bf16.mxu0 0
    %244 = vmatpush1.bf16.msra.mxu0 %v215
    %245 = vmatprep.subr.bf16.mxu0 0
    %246 = vmatpush1.bf16.msra.mxu0 %v214
    %247 = vmatprep.subr.bf16.mxu0 0
    %248 = vmatpush1.bf16.msra.mxu0 %v213
    %249 = vmatprep.subr.bf16.mxu0 0
    %250 = vmatpush1.bf16.msra.mxu0 %v212
    %251 = vmatprep.subr.bf16.mxu0 0
    %252 = vmatpush1.bf16.msra.mxu0 %v211
    %253 = vmatprep.subr.bf16.mxu0 0
    %254 = vmatpush1.bf16.msra.mxu0 %v210
    %255 = vmatprep.subr.bf16.mxu0 0
    %256 = vmatpush1.bf16.msra.mxu0 %v209
    %257 = vmatprep.subr.bf16.mxu0 0
    %258 = vmatpush2.bf16.msra.mxu0 %v224
    %259 = vmatprep.subr.bf16.mxu0 0
    %260 = vmatpush2.bf16.msra.mxu0 %v223
    %261 = vmatprep.subr.bf16.mxu0 0
    %262 = vmatpush2.bf16.msra.mxu0 %v222
    %263 = vmatprep.subr.bf16.mxu0 0
    %264 = vmatpush2.bf16.msra.mxu0 %v221
    %265 = vmatprep.subr.bf16.mxu0 0
    %266 = vmatpush2.bf16.msra.mxu0 %v220
    %267 = vmatprep.subr.bf16.mxu0 0
    %268 = vmatpush2.bf16.msra.mxu0 %v219
    %269 = vmatprep.subr.bf16.mxu0 0
    %270 = vmatpush2.bf16.msra.mxu0 %v218
    %271 = vmatprep.subr.bf16.mxu0 0
    %272 = vmatpush2.bf16.msra.mxu0 %v217
    %273 = vmatprep.mubr.bf16.mxu0 %v105
    %274 = vmatmul.mubr.bf16.gmra.mxu0 %v104
    %v275 = vpop.f32.mrf.mxu0
    %v276 = vadd.f32 %v143, %v275
    %v277 = vpop.f32.mrf.mxu0
    %v278 = vpop.f32.mrf.mxu0
    %v279 = vpop.f32.mrf.mxu0
    %280 = vdwg.mxu0
    %v281 = vmax.f32 %v276, 0.0
    %v282 = vpack.c.bf16 %v281, %v281
    %v283 = vld [vmem:[#allocation9] sm:$0xf]
    %v284 = vld [vmem:[#allocation9 + $0x4] sm:$0xf]
    %v285 = vld [vmem:[#allocation9 + $0x8] sm:$0xf]
    %v286 = vld [vmem:[#allocation9 + $0xc] sm:$0xf]
    %v287 = vld [vmem:[#allocation9 + $0x10] sm:$0xf]
    %v288 = vld [vmem:[#allocation9 + $0x14] sm:$0xf]
    %v289 = vld [vmem:[#allocation9 + $0x18] sm:$0xf]
    %v290 = vld [vmem:[#allocation9 + $0x1c] sm:$0xf]
    %v291 = vld [vmem:[#allocation9 + $0x20] sm:$0xf]
    %v292 = vld [vmem:[#allocation9 + $0x24] sm:$0xf]
    %v293 = vld [vmem:[#allocation9 + $0x28] sm:$0xf]
    %v294 = vld [vmem:[#allocation9 + $0x2c] sm:$0xf]
    %v295 = vld [vmem:[#allocation9 + $0x30] sm:$0xf]
    %v296 = vld [vmem:[#allocation9 + $0x34] sm:$0xf]
    %v297 = vld [vmem:[#allocation9 + $0x38] sm:$0xf]
    %v298 = vld [vmem:[#allocation9 + $0x3c] sm:$0xf]
    %v299 = vld [vmem:[%s5] sm:$0x1]
    %v301 = vlaneseq
    %v302 = vshrl.u32 %v301, 7
    %v303 = vsub.s32 0, %v302
    %v304 = vrot.slane %v299, %v303
    %v322 = vunpack.c.l.b16 %v283
    %v323 = vunpack.c.l.b16 %v284
    %v324 = vunpack.c.l.b16 %v285
    %v325 = vunpack.c.l.b16 %v286
    %v326 = vunpack.c.l.b16 %v287
    %v327 = vunpack.c.l.b16 %v288
    %v328 = vunpack.c.l.b16 %v289
    %v329 = vunpack.c.l.b16 %v290
    %v330 = vunpack.c.l.b16 %v291
    %v331 = vunpack.c.l.b16 %v292
    %v332 = vunpack.c.l.b16 %v293
    %v333 = vunpack.c.l.b16 %v294
    %v334 = vunpack.c.l.b16 %v295
    %v335 = vunpack.c.l.b16 %v296
    %v336 = vunpack.c.l.b16 %v297
    %v337 = vunpack.c.l.b16 %v298
    %v338 = vpack.c.b16 %v323, %v322
    %v339 = vpack.c.b16 %v325, %v324
    %v340 = vpack.c.b16 %v327, %v326
    %v341 = vpack.c.b16 %v329, %v328
    %v342 = vpack.c.b16 %v331, %v330
    %v343 = vpack.c.b16 %v333, %v332
    %v344 = vpack.c.b16 %v335, %v334
    %v345 = vpack.c.b16 %v337, %v336
    %354 = vmatprep.subr.bf16.mxu0 0
    %355 = vmatpush1.bf16.msra.mxu0 %v345
    %356 = vmatprep.subr.bf16.mxu0 0
    %357 = vmatpush1.bf16.msra.mxu0 %v344
    %358 = vmatprep.subr.bf16.mxu0 0
    %359 = vmatpush1.bf16.msra.mxu0 %v343
    %360 = vmatprep.subr.bf16.mxu0 0
    %361 = vmatpush1.bf16.msra.mxu0 %v342
    %362 = vmatprep.subr.bf16.mxu0 0
    %363 = vmatpush1.bf16.msra.mxu0 %v341
    %364 = vmatprep.subr.bf16.mxu0 0
    %365 = vmatpush1.bf16.msra.mxu0 %v340
    %366 = vmatprep.subr.bf16.mxu0 0
    %367 = vmatpush1.bf16.msra.mxu0 %v339
    %368 = vmatprep.subr.bf16.mxu0 0
    %369 = vmatpush1.bf16.msra.mxu0 %v338
    %370 = vmatprep.subr.bf16.mxu0 0
    %371 = vmatpush2.bf16.msra.mxu0 0
    %372 = vmatprep.subr.bf16.mxu0 0
    %373 = vmatpush2.bf16.msra.mxu0 0
    %374 = vmatprep.subr.bf16.mxu0 0
    %375 = vmatpush2.bf16.msra.mxu0 0
    %376 = vmatprep.subr.bf16.mxu0 0
    %377 = vmatpush2.bf16.msra.mxu0 0
    %378 = vmatprep.subr.bf16.mxu0 0
    %379 = vmatpush2.bf16.msra.mxu0 0
    %380 = vmatprep.subr.bf16.mxu0 0
    %381 = vmatpush2.bf16.msra.mxu0 0
    %382 = vmatprep.subr.bf16.mxu0 0
    %383 = vmatpush2.bf16.msra.mxu0 0
    %384 = vmatprep.subr.bf16.mxu0 0
    %385 = vmatpush2.bf16.msra.mxu0 0
    %386 = vmatprep.mubr.bf16.mxu0 0
    %387 = vmatmul.mubr.bf16.gmra.mxu0 %v282
    %v388 = vpop.f32.mrf.mxu0
    %v389 = vadd.f32 %v304, %v388
    %v390 = vpop.f32.mrf.mxu0
    %v391 = vpop.f32.mrf.mxu0
    %v392 = vpop.f32.mrf.mxu0
    %393 = vdwg.mxu0
    %v394 = vmax.f32 %v389, 0.0
    %v395 = vpack.c.bf16 %v394, %v394
    %v396 = vld [vmem:[#allocation10] sm:$0xf]
    %v397 = vld [vmem:[#allocation10 + $0x4] sm:$0xf]
    %v398 = vld [vmem:[#allocation10 + $0x8] sm:$0xf]
    %v399 = vld [vmem:[#allocation10 + $0xc] sm:$0xf]
    %v400 = vld [vmem:[#allocation10 + $0x10] sm:$0xf]
    %v401 = vld [vmem:[#allocation10 + $0x14] sm:$0xf]
    %v402 = vld [vmem:[#allocation10 + $0x18] sm:$0xf]
    %v403 = vld [vmem:[#allocation10 + $0x1c] sm:$0xf]
    %v404 = vld [vmem:[#allocation10 + $0x20] sm:$0xf]
    %v405 = vld [vmem:[#allocation10 + $0x24] sm:$0xf]
    %v406 = vld [vmem:[#allocation10 + $0x28] sm:$0xf]
    %v407 = vld [vmem:[#allocation10 + $0x2c] sm:$0xf]
    %v408 = vld [vmem:[#allocation10 + $0x30] sm:$0xf]
    %v409 = vld [vmem:[#allocation10 + $0x34] sm:$0xf]
    %v410 = vld [vmem:[#allocation10 + $0x38] sm:$0xf]
    %v411 = vld [vmem:[#allocation10 + $0x3c] sm:$0xf]
    %v412 = vld [vmem:[%s7] sm:$0x1]
    %v414 = vlaneseq
    %v415 = vshrl.u32 %v414, 7
    %v416 = vsub.s32 0, %v415
    %v417 = vrot.slane %v412, %v416
    %v435 = vunpack.c.l.b16 %v396
    %v436 = vunpack.c.l.b16 %v397
    %v437 = vunpack.c.l.b16 %v398
    %v438 = vunpack.c.l.b16 %v399
    %v439 = vunpack.c.l.b16 %v400
    %v440 = vunpack.c.l.b16 %v401
    %v441 = vunpack.c.l.b16 %v402
    %v442 = vunpack.c.l.b16 %v403
    %v443 = vunpack.c.l.b16 %v404
    %v444 = vunpack.c.l.b16 %v405
    %v445 = vunpack.c.l.b16 %v406
    %v446 = vunpack.c.l.b16 %v407
    %v447 = vunpack.c.l.b16 %v408
    %v448 = vunpack.c.l.b16 %v409
    %v449 = vunpack.c.l.b16 %v410
    %v450 = vunpack.c.l.b16 %v411
    %v451 = vpack.c.b16 %v436, %v435
    %v452 = vpack.c.b16 %v438, %v437
    %v453 = vpack.c.b16 %v440, %v439
    %v454 = vpack.c.b16 %v442, %v441
    %v455 = vpack.c.b16 %v444, %v443
    %v456 = vpack.c.b16 %v446, %v445
    %v457 = vpack.c.b16 %v448, %v447
    %v458 = vpack.c.b16 %v450, %v449
    %467 = vmatprep.subr.bf16.mxu0 0
    %468 = vmatpush1.bf16.msra.mxu0 %v458
    %469 = vmatprep.subr.bf16.mxu0 0
    %470 = vmatpush1.bf16.msra.mxu0 %v457
    %471 = vmatprep.subr.bf16.mxu0 0
    %472 = vmatpush1.bf16.msra.mxu0 %v456
    %473 = vmatprep.subr.bf16.mxu0 0
    %474 = vmatpush1.bf16.msra.mxu0 %v455
    %475 = vmatprep.subr.bf16.mxu0 0
    %476 = vmatpush1.bf16.msra.mxu0 %v454
    %477 = vmatprep.subr.bf16.mxu0 0
    %478 = vmatpush1.bf16.msra.mxu0 %v453
    %479 = vmatprep.subr.bf16.mxu0 0
    %480 = vmatpush1.bf16.msra.mxu0 %v452
    %481 = vmatprep.subr.bf16.mxu0 0
    %482 = vmatpush1.bf16.msra.mxu0 %v451
    %483 = vmatprep.subr.bf16.mxu0 0
    %484 = vmatpush2.bf16.msra.mxu0 0
    %485 = vmatprep.subr.bf16.mxu0 0
    %486 = vmatpush2.bf16.msra.mxu0 0
    %487 = vmatprep.subr.bf16.mxu0 0
    %488 = vmatpush2.bf16.msra.mxu0 0
    %489 = vmatprep.subr.bf16.mxu0 0
    %490 = vmatpush2.bf16.msra.mxu0 0
    %491 = vmatprep.subr.bf16.mxu0 0
    %492 = vmatpush2.bf16.msra.mxu0 0
    %493 = vmatprep.subr.bf16.mxu0 0
    %494 = vmatpush2.bf16.msra.mxu0 0
    %495 = vmatprep.subr.bf16.mxu0 0
    %496 = vmatpush2.bf16.msra.mxu0 0
    %497 = vmatprep.subr.bf16.mxu0 0
    %498 = vmatpush2.bf16.msra.mxu0 0
    %499 = vmatprep.mubr.bf16.mxu0 0
    %500 = vmatmul.mubr.bf16.gmra.mxu0 %v395
    %v501 = vpop.f32.mrf.mxu0
    %v502 = vadd.f32 %v417, %v501
    %v503 = vpop.f32.mrf.mxu0
    %v504 = vpop.f32.mrf.mxu0
    %v505 = vpop.f32.mrf.mxu0
    %506 = vdwg.mxu0
    %v507 = vmax.f32 %v502, 0.0
    %v508 = vpack.c.bf16 %v507, %v507
    %v509 = vld [vmem:[#allocation12] sm:$0xf]
    %v510 = vld [vmem:[#allocation12 + $0x4] sm:$0xf]
    %v511 = vld [vmem:[#allocation12 + $0x8] sm:$0xf]
    %v512 = vld [vmem:[#allocation12 + $0xc] sm:$0xf]
    %v513 = vld [vmem:[#allocation12 + $0x10] sm:$0xf]
    %v514 = vld [vmem:[#allocation12 + $0x14] sm:$0xf]
    %v515 = vld [vmem:[#allocation12 + $0x18] sm:$0xf]
    %v516 = vld [vmem:[#allocation12 + $0x1c] sm:$0xf]
    %v517 = vld [vmem:[#allocation12 + $0x20] sm:$0xf]
    %v518 = vld [vmem:[#allocation12 + $0x24] sm:$0xf]
    %v519 = vld [vmem:[#allocation12 + $0x28] sm:$0xf]
    %v520 = vld [vmem:[#allocation12 + $0x2c] sm:$0xf]
    %v521 = vld [vmem:[#allocation12 + $0x30] sm:$0xf]
    %v522 = vld [vmem:[#allocation12 + $0x34] sm:$0xf]
    %v523 = vld [vmem:[#allocation12 + $0x38] sm:$0xf]
    %v524 = vld [vmem:[#allocation12 + $0x3c] sm:$0xf]
    %v525 = vld [vmem:[%s9] sm:$0x1]
    %v527 = vlaneseq
    %v528 = vshrl.u32 %v527, 7
    %v529 = vsub.s32 0, %v528
    %v530 = vrot.slane %v525, %v529
    %v548 = vunpack.c.l.b16 %v509
    %v549 = vunpack.c.l.b16 %v510
    %v550 = vunpack.c.l.b16 %v511
    %v551 = vunpack.c.l.b16 %v512
    %v552 = vunpack.c.l.b16 %v513
    %v553 = vunpack.c.l.b16 %v514
    %v554 = vunpack.c.l.b16 %v515
    %v555 = vunpack.c.l.b16 %v516
    %v556 = vunpack.c.l.b16 %v517
    %v557 = vunpack.c.l.b16 %v518
    %v558 = vunpack.c.l.b16 %v519
    %v559 = vunpack.c.l.b16 %v520
    %v560 = vunpack.c.l.b16 %v521
    %v561 = vunpack.c.l.b16 %v522
    %v562 = vunpack.c.l.b16 %v523
    %v563 = vunpack.c.l.b16 %v524
    %v564 = vpack.c.b16 %v549, %v548
    %v565 = vpack.c.b16 %v551, %v550
    %v566 = vpack.c.b16 %v553, %v552
    %v567 = vpack.c.b16 %v555, %v554
    %v568 = vpack.c.b16 %v557, %v556
    %v569 = vpack.c.b16 %v559, %v558
    %v570 = vpack.c.b16 %v561, %v560
    %v571 = vpack.c.b16 %v563, %v562
    %580 = vmatprep.subr.bf16.mxu0 0
    %581 = vmatpush1.bf16.msra.mxu0 %v571
    %582 = vmatprep.subr.bf16.mxu0 0
    %583 = vmatpush1.bf16.msra.mxu0 %v570
    %584 = vmatprep.subr.bf16.mxu0 0
    %585 = vmatpush1.bf16.msra.mxu0 %v569
    %586 = vmatprep.subr.bf16.mxu0 0
    %587 = vmatpush1.bf16.msra.mxu0 %v568
    %588 = vmatprep.subr.bf16.mxu0 0
    %589 = vmatpush1.bf16.msra.mxu0 %v567
    %590 = vmatprep.subr.bf16.mxu0 0
    %591 = vmatpush1.bf16.msra.mxu0 %v566
    %592 = vmatprep.subr.bf16.mxu0 0
    %593 = vmatpush1.bf16.msra.mxu0 %v565
    %594 = vmatprep.subr.bf16.mxu0 0
    %595 = vmatpush1.bf16.msra.mxu0 %v564
    %596 = vmatprep.subr.bf16.mxu0 0
    %597 = vmatpush2.bf16.msra.mxu0 0
    %598 = vmatprep.subr.bf16.mxu0 0
    %599 = vmatpush2.bf16.msra.mxu0 0
    %600 = vmatprep.subr.bf16.mxu0 0
    %601 = vmatpush2.bf16.msra.mxu0 0
    %602 = vmatprep.subr.bf16.mxu0 0
    %603 = vmatpush2.bf16.msra.mxu0 0
    %604 = vmatprep.subr.bf16.mxu0 0
    %605 = vmatpush2.bf16.msra.mxu0 0
    %606 = vmatprep.subr.bf16.mxu0 0
    %607 = vmatpush2.bf16.msra.mxu0 0
    %608 = vmatprep.subr.bf16.mxu0 0
    %609 = vmatpush2.bf16.msra.mxu0 0
    %610 = vmatprep.subr.bf16.mxu0 0
    %611 = vmatpush2.bf16.msra.mxu0 0
    %612 = vmatprep.mubr.bf16.mxu0 0
    %613 = vmatmul.mubr.bf16.gmra.mxu0 %v508
    %v614 = vpop.f32.mrf.mxu0
    %v615 = vadd.f32 %v530, %v614
    %v616 = vpop.f32.mrf.mxu0
    %v617 = vpop.f32.mrf.mxu0
    %v618 = vpop.f32.mrf.mxu0
    %619 = vdwg.mxu0
    %v620 = vpack.c.bf16 %v615, %v615
    %621 = vst [vmem:[#allocation13] sm:$0xf] %v620
    // Predicated region
    $region58: #{tpu_custom_call.1} parent=1 // pred_check
      _
    $region59: #{tpu_custom_call.1} parent=1 // pred_check_branch
      %623 = sbr.rel (0) target = $region61
    $region60: #{tpu_custom_call.1} parent=1 // pred_region
      %s625 = ssub.s32 64, 64
      %626 = vsyncadd [#allocation6], %s625
      %s628 = sshll.u32 [#allocation13], 4
      %s629 = int_to_ptr.vmem [resolvable:$true] %s628
      %631 = dma.vmem_to_hbm [thread:$0]  %s629, 64, %s10, [#allocation6]
    $region61: #{tpu_custom_call.1} parent=1 // pred_fallthru
      _
    // Predicated region
    $region62: #{tpu_custom_call.1} parent=1 // pred_check
      _
    $region63: #{tpu_custom_call.1} parent=1 // pred_check_branch
      %633 = sbr.rel (0) target = $region65
    $region64: #{tpu_custom_call.1} parent=1 // pred_region
      %634 = dma.done [#allocation6], 64
    $region65: #{tpu_custom_call.1} parent=1 // pred_fallthru
      _
    %635 = vsyncpa [#allocation5], 1
    %636 = vsyncpa [#allocation8], 1
    %637 = vsyncpa [#allocation11], 1
    %638 = vsyncpa [#allocation6], 1

</llo_original>
